<compile_context>
chip_gen: v5e
topology: v5e:2x2
jax: 0.10.0
libtpu: 0.0.40
codegen_flags: <defaults>
</compile_context>

<pallas_src>
import functools

import numpy as np
import jax
import jax.numpy as jnp
from jax.experimental import pallas as pl
from jax.experimental.pallas import tpu as pltpu

EPS = 1e-5
LEAKY_SLOPE = 0.2
# Conservative scoped-VMEM budget: resident operands total < 1 MiB at these
# shapes; 32 MiB stays well inside v7x's 64 MiB physical VMEM (v5e/v6e: 128 MiB).
_VMEM_LIMIT = 32 * 1024 * 1024


# ----------------------------------------------------------------------------
# The single fused kernel: 4 x (conv -> BN(batch stats) -> LReLU) -> FC -> sigmoid
# ----------------------------------------------------------------------------
def _disc_fused_kernel(n_layers, *refs):
    """Whole Disc forward on VMEM-resident data (single grid point).

    refs = [x, (Wd, P, gamma_flat, beta_flat) * n_layers, wfc, bfc,   # inputs
            out, x5]                                                  # outputs
    """
    x_ref = refs[0]
    wfc_ref = refs[1 + 4 * n_layers]
    bfc_ref = refs[2 + 4 * n_layers]
    out_ref = refs[3 + 4 * n_layers]
    x5_ref = refs[4 + 4 * n_layers]

    h = x_ref[...]                               # (N, D) bf16, channel-major flat
    act = None
    for li in range(n_layers):                   # static python loop (unrolled)
        wd = refs[1 + 4 * li][...]               # (Din, Dout) bf16 dense conv op
        p = refs[2 + 4 * li][...]                # (Dout, Dout) f32 channel-mean op
        gamma = refs[3 + 4 * li][...]            # (1, Dout) f32
        beta = refs[4 + 4 * li][...]             # (1, Dout) f32

        # Conv1d(k=4, s=2, p=1, bias=False) == one lane-dense MXU matmul against
        # the unrolled conv operator; f32 accumulation.
        conv = jnp.dot(h, wd, preferred_element_type=jnp.float32)   # (N, Dout)

        # Training-mode BN stats over (N, L): sum over batch (sublanes), then a
        # channel-block averaging matmul broadcasts per-channel E[x] / E[x^2]
        # back to the flat (channel-major) lane layout.
        csum = jnp.sum(conv, axis=0, keepdims=True)                 # (1, Dout)
        csq = jnp.sum(conv * conv, axis=0, keepdims=True)           # (1, Dout)
        mean = jnp.dot(csum, p, preferred_element_type=jnp.float32)
        msq = jnp.dot(csq, p, preferred_element_type=jnp.float32)
        var = jnp.maximum(msq - mean * mean, 0.0)

        scale = gamma * jax.lax.rsqrt(var + EPS)     # folded BN scale
        shift = beta - mean * scale                  # folded BN shift
        y = conv * scale + shift
        act = jnp.where(y >= 0, y, LEAKY_SLOPE * y)  # LeakyReLU(0.2), f32
        h = act.astype(jnp.bfloat16)                 # operand for next MXU matmul

    # `act` is already the torch channel-major flatten of the last conv block.
    x5_ref[...] = act

    # Fused FC + sigmoid epilogue.
    # TODO(synk): nn.Dropout after the Linear is stochastic; treated as identity
    # (deterministic / eval-mode forward).
    logit = jnp.dot(act, wfc_ref[...], preferred_element_type=jnp.float32)
    out_ref[...] = jax.nn.sigmoid(logit + bfc_ref[...])


# ----------------------------------------------------------------------------
# Wrapper-side operator construction (tiny, weight preprocessing only)
# ----------------------------------------------------------------------------
def _dense_conv_operator(weight, lin):
    """Unrolled Conv1d(k=4, s=2, p=1, bias=False) as a dense matrix.

    weight: (Cout, Cin, 4) torch layout.  Acts on a channel-major flattened
    input of width Cin*Lin, producing a channel-major flattened output of
    width Cout*(Lin//2):  out_flat = in_flat @ Wd.
    """
    cout, cin, k = weight.shape
    lout = lin // 2
    sel = np.zeros((lin, lout, k), np.float32)
    for l in range(lout):
        for t in range(k):
            j = 2 * l + t - 1                 # stride 2, left pad 1
            if 0 <= j < lin:
                sel[j, l, t] = 1.0
    wd = jnp.einsum("jlt,oit->ijol", jnp.asarray(sel), weight.astype(jnp.float32))
    return wd.reshape(cin * lin, cout * lout)


def _channel_mean_operator(cout, lout, batch):
    """(Cout*Lout, Cout*Lout) matrix: right-multiplying a per-lane batch sum by
    it yields the per-channel mean broadcast to every lane of that channel's
    block (channel-major flat layout)."""
    blk = np.kron(np.eye(cout, dtype=np.float32),
                  np.ones((lout, lout), np.float32)) / float(batch * lout)
    return jnp.asarray(blk, dtype=jnp.float32)


def _full2d(i):
    return (0, 0)          # every operand is one full 2-D block


@jax.jit
def disc_forward(x, conv_weights, gammas, betas, wfc, bfc):
    """x: (N, 2, DIM_HR) torch NCL.  Returns (sigmoid(fc(x5)), x5)."""
    n, cin0, lin0 = x.shape
    n_layers = len(conv_weights)

    # Channel-major flatten of the NCL input (free reshape) + bf16 pre-cast for
    # the first MXU matmul (accumulation stays f32 in-kernel).
    args = [x.reshape(n, cin0 * lin0).astype(jnp.bfloat16)]

    flops, transcendentals = 0, 0
    lin = lin0
    for w, g, b in zip(conv_weights, gammas, betas):
        cout = w.shape[0]
        lout = lin // 2
        dout = cout * lout
        wd = _dense_conv_operator(w, lin)
        args.append(wd.astype(jnp.bfloat16))                       # conv operator
        args.append(_channel_mean_operator(cout, lout, n))         # BN stats op
        args.append(jnp.repeat(g.astype(jnp.float32), lout).reshape(1, dout))
        args.append(jnp.repeat(b.astype(jnp.float32), lout).reshape(1, dout))
        flops += 2 * n * wd.shape[0] * dout + 2 * 2 * dout * dout
        transcendentals += dout
        lin = lout
    feat = conv_weights[-1].shape[0] * lin
    args.append(wfc.astype(jnp.float32).reshape(1, feat).T)         # (F, 1)
    args.append(bfc.astype(jnp.float32).reshape(1, 1))
    flops += 2 * n * feat
    transcendentals += n
    bytes_accessed = (sum(a.size * a.dtype.itemsize for a in args)
                      + n * (feat + 1) * 4)

    out, x5 = pl.pallas_call(
        functools.partial(_disc_fused_kernel, n_layers),
        out_shape=(jax.ShapeDtypeStruct((n, 1), jnp.float32),
                   jax.ShapeDtypeStruct((n, feat), jnp.float32)),
        grid_spec=pltpu.PrefetchScalarGridSpec(
            num_scalar_prefetch=0,
            grid=(1,),
            in_specs=[pl.BlockSpec(a.shape, _full2d) for a in args],
            out_specs=(pl.BlockSpec((n, 1), _full2d),
                       pl.BlockSpec((n, feat), _full2d)),
        ),
        compiler_params=pltpu.CompilerParams(
            # Single grid point: no megacore-parallel axis.  On v7x one TC will
            # idle, but BN couples the whole batch and launch overhead dominates
            # at these sizes, so a single resident program wins.
            dimension_semantics=("arbitrary",),
            vmem_limit_bytes=_VMEM_LIMIT),
        cost_estimate=pl.CostEstimate(flops=flops,
                                      transcendentals=transcendentals,
                                      bytes_accessed=bytes_accessed),
    )(*args)
    return out, x5


# ----------------------------------------------------------------------------
# Pure-JAX reference of the PyTorch forward (training-mode BN).  Conv operands
# are cast to bf16 to mirror the kernel's MXU precision.
# ----------------------------------------------------------------------------
@jax.jit
def disc_reference(x, conv_weights, gammas, betas, wfc, bfc):
    h = x
    for w, g, b in zip(conv_weights, gammas, betas):
        y = jax.lax.conv_general_dilated(
            h.astype(jnp.bfloat16), w.astype(jnp.bfloat16),
            window_strides=(2,), padding=[(1, 1)],
            dimension_numbers=("NCH", "OIH", "NCH"),
            preferred_element_type=jnp.float32)
        mean = jnp.mean(y, axis=(0, 2), keepdims=True)
        var = jnp.mean((y - mean) ** 2, axis=(0, 2), keepdims=True)
        y = (y - mean) * jax.lax.rsqrt(var + EPS)
        y = y * g.reshape(1, -1, 1) + b.reshape(1, -1, 1)
        h = jnp.where(y >= 0, y, LEAKY_SLOPE * y)
    x5 = h.reshape(h.shape[0], -1)                  # NCL channel-major flatten
    logit = x5 @ wfc.T + bfc
    return jax.nn.sigmoid(logit), x5


if __name__ == "__main__":
    # Small shapes consistent with Disc(num_fea=4) and config.DIM_HR=64:
    # input (N=2, 2 channels [hr + derivative], L=64);
    # fc in-features = num_fea*8*DIM_HR/16 = 128.
    N, NUM_FEA, DIM_HR = 2, 4, 64
    chans = [2, NUM_FEA, 2 * NUM_FEA, 4 * NUM_FEA, 8 * NUM_FEA]
    F = NUM_FEA * 8 * DIM_HR // 16

    key = jax.random.PRNGKey(0)
    keys = jax.random.split(key, 16)
    x = jax.random.normal(keys[0], (N, 2, DIM_HR), jnp.float32)

    conv_weights, gammas, betas = [], [], []
    for li in range(4):
        cin, cout = chans[li], chans[li + 1]
        conv_weights.append(jax.random.normal(keys[1 + li], (cout, cin, 4),
                                              jnp.float32) / jnp.sqrt(4.0 * cin))
        # Synthetic BN affine (module defaults are gamma=1, beta=0); slightly
        # randomized so the folded-affine path is actually exercised.
        gammas.append(1.0 + 0.1 * jax.random.normal(keys[5 + li], (cout,), jnp.float32))
        betas.append(0.1 * jax.random.normal(keys[9 + li], (cout,), jnp.float32))

    wfc = jax.random.normal(keys[13], (1, F), jnp.float32) / jnp.sqrt(float(F))
    bfc = 0.1 * jax.random.normal(keys[14], (1,), jnp.float32)

    out, x5 = disc_forward(x, conv_weights, gammas, betas, wfc, bfc)
    out, x5 = jax.block_until_ready((out, x5))

    out_ref, x5_ref = disc_reference(x, conv_weights, gammas, betas, wfc, bfc)
    assert out.shape == (N, 1) and x5.shape == (N, F), (out.shape, x5.shape)
    # Both sides use bf16 MXU conv operands; residual diffs come from f32
    # accumulation order and the one-pass vs two-pass BN variance.
    assert jnp.allclose(x5, x5_ref, atol=3e-2, rtol=3e-2), \
        float(jnp.max(jnp.abs(x5 - x5_ref)))
    assert jnp.allclose(out, out_ref, atol=3e-2, rtol=3e-2), \
        float(jnp.max(jnp.abs(out - out_ref)))

    print("KERNEL_OK")
</pallas_src>

<mosaic_0001>
module attributes {stable_mosaic.version = 11 : i64} {
  func.func @_disc_fused_kernel(%arg0: i32, %arg1: memref<2x128xbf16, #tpu.memory_space<vmem>>, %arg2: memref<128x128xbf16, #tpu.memory_space<vmem>>, %arg3: memref<128x128xf32, #tpu.memory_space<vmem>>, %arg4: memref<1x128xf32, #tpu.memory_space<vmem>>, %arg5: memref<1x128xf32, #tpu.memory_space<vmem>>, %arg6: memref<128x128xbf16, #tpu.memory_space<vmem>>, %arg7: memref<128x128xf32, #tpu.memory_space<vmem>>, %arg8: memref<1x128xf32, #tpu.memory_space<vmem>>, %arg9: memref<1x128xf32, #tpu.memory_space<vmem>>, %arg10: memref<128x128xbf16, #tpu.memory_space<vmem>>, %arg11: memref<128x128xf32, #tpu.memory_space<vmem>>, %arg12: memref<1x128xf32, #tpu.memory_space<vmem>>, %arg13: memref<1x128xf32, #tpu.memory_space<vmem>>, %arg14: memref<128x128xbf16, #tpu.memory_space<vmem>>, %arg15: memref<128x128xf32, #tpu.memory_space<vmem>>, %arg16: memref<1x128xf32, #tpu.memory_space<vmem>>, %arg17: memref<1x128xf32, #tpu.memory_space<vmem>>, %arg18: memref<128x1xf32, #tpu.memory_space<vmem>>, %arg19: memref<1x1xf32, #tpu.memory_space<vmem>>, %arg20: memref<2x1xf32, #tpu.memory_space<vmem>>, %arg21: memref<2x128xf32, #tpu.memory_space<vmem>>) attributes {dimension_semantics = [#tpu.dimension_semantics<arbitrary>], iteration_bounds = array<i64: 1>, scalar_prefetch = 0 : i64, scratch_operands = 0 : i64, tpu.core_type = #tpu.core_type<tc>, window_params = [{pipeline_mode = #tpu.pipeline_mode<synchronous>, transform_indices = @transform_0, window_bounds = array<i64: 2, 128>}, {pipeline_mode = #tpu.pipeline_mode<synchronous>, transform_indices = @transform_1, window_bounds = array<i64: 128, 128>}, {pipeline_mode = #tpu.pipeline_mode<synchronous>, transform_indices = @transform_2, window_bounds = array<i64: 128, 128>}, {pipeline_mode = #tpu.pipeline_mode<synchronous>, transform_indices = @transform_3, window_bounds = array<i64: 1, 128>}, {pipeline_mode = #tpu.pipeline_mode<synchronous>, transform_indices = @transform_4, window_bounds = array<i64: 1, 128>}, {pipeline_mode = #tpu.pipeline_mode<synchronous>, transform_indices = @transform_5, window_bounds = array<i64: 128, 128>}, {pipeline_mode = #tpu.pipeline_mode<synchronous>, transform_indices = @transform_6, window_bounds = array<i64: 128, 128>}, {pipeline_mode = #tpu.pipeline_mode<synchronous>, transform_indices = @transform_7, window_bounds = array<i64: 1, 128>}, {pipeline_mode = #tpu.pipeline_mode<synchronous>, transform_indices = @transform_8, window_bounds = array<i64: 1, 128>}, {pipeline_mode = #tpu.pipeline_mode<synchronous>, transform_indices = @transform_9, window_bounds = array<i64: 128, 128>}, {pipeline_mode = #tpu.pipeline_mode<synchronous>, transform_indices = @transform_10, window_bounds = array<i64: 128, 128>}, {pipeline_mode = #tpu.pipeline_mode<synchronous>, transform_indices = @transform_11, window_bounds = array<i64: 1, 128>}, {pipeline_mode = #tpu.pipeline_mode<synchronous>, transform_indices = @transform_12, window_bounds = array<i64: 1, 128>}, {pipeline_mode = #tpu.pipeline_mode<synchronous>, transform_indices = @transform_13, window_bounds = array<i64: 128, 128>}, {pipeline_mode = #tpu.pipeline_mode<synchronous>, transform_indices = @transform_14, window_bounds = array<i64: 128, 128>}, {pipeline_mode = #tpu.pipeline_mode<synchronous>, transform_indices = @transform_15, window_bounds = array<i64: 1, 128>}, {pipeline_mode = #tpu.pipeline_mode<synchronous>, transform_indices = @transform_16, window_bounds = array<i64: 1, 128>}, {pipeline_mode = #tpu.pipeline_mode<synchronous>, transform_indices = @transform_17, window_bounds = array<i64: 128, 1>}, {pipeline_mode = #tpu.pipeline_mode<synchronous>, transform_indices = @transform_18, window_bounds = array<i64: 1, 1>}, {pipeline_mode = #tpu.pipeline_mode<synchronous>, transform_indices = @transform_19, window_bounds = array<i64: 2, 1>}, {pipeline_mode = #tpu.pipeline_mode<synchronous>, transform_indices = @transform_20, window_bounds = array<i64: 2, 128>}]} {
    %c0 = arith.constant 0 : index
    %c0_0 = arith.constant 0 : index
    %0 = vector.load %arg1[%c0, %c0_0] : memref<2x128xbf16, #tpu.memory_space<vmem>>, vector<2x128xbf16>
    %c0_1 = arith.constant 0 : index
    %c0_2 = arith.constant 0 : index
    %1 = vector.load %arg2[%c0_1, %c0_2] : memref<128x128xbf16, #tpu.memory_space<vmem>>, vector<128x128xbf16>
    %c0_3 = arith.constant 0 : index
    %c0_4 = arith.constant 0 : index
    %2 = vector.load %arg3[%c0_3, %c0_4] : memref<128x128xf32, #tpu.memory_space<vmem>>, vector<128x128xf32>
    %c0_5 = arith.constant 0 : index
    %c0_6 = arith.constant 0 : index
    %3 = vector.load %arg4[%c0_5, %c0_6] : memref<1x128xf32, #tpu.memory_space<vmem>>, vector<1x128xf32>
    %c0_7 = arith.constant 0 : index
    %c0_8 = arith.constant 0 : index
    %4 = vector.load %arg5[%c0_7, %c0_8] : memref<1x128xf32, #tpu.memory_space<vmem>>, vector<1x128xf32>
    %cst = arith.constant dense<0.000000e+00> : vector<2x128xf32>
    %5 = tpu.matmul %0, %1, %cst {dimension_numbers = #tpu.dot_dimension_numbers<[1], [0], [0], [1], [0, 0, 1, 1], [], []>} : vector<2x128xbf16>, vector<128x128xbf16>, vector<2x128xf32> -> vector<2x128xf32>
    %cst_9 = arith.constant dense<0.000000e+00> : vector<128xf32>
    %6 = vector.multi_reduction <add>, %5, %cst_9 [0] : vector<2x128xf32> to vector<128xf32>
    %7 = vector.shape_cast %6 : vector<128xf32> to vector<1x128xf32>
    %8 = arith.mulf %5, %5 : vector<2x128xf32>
    %cst_10 = arith.constant dense<0.000000e+00> : vector<128xf32>
    %9 = vector.multi_reduction <add>, %8, %cst_10 [0] : vector<2x128xf32> to vector<128xf32>
    %10 = vector.shape_cast %9 : vector<128xf32> to vector<1x128xf32>
    %cst_11 = arith.constant dense<0.000000e+00> : vector<1x128xf32>
    %11 = tpu.matmul %7, %2, %cst_11 {dimension_numbers = #tpu.dot_dimension_numbers<[1], [0], [0], [1], [0, 0, 1, 1], [], []>} : vector<1x128xf32>, vector<128x128xf32>, vector<1x128xf32> -> vector<1x128xf32>
    %cst_12 = arith.constant dense<0.000000e+00> : vector<1x128xf32>
    %12 = tpu.matmul %10, %2, %cst_12 {dimension_numbers = #tpu.dot_dimension_numbers<[1], [0], [0], [1], [0, 0, 1, 1], [], []>} : vector<1x128xf32>, vector<128x128xf32>, vector<1x128xf32> -> vector<1x128xf32>
    %13 = arith.mulf %11, %11 : vector<1x128xf32>
    %14 = arith.subf %12, %13 : vector<1x128xf32>
    %cst_13 = arith.constant 0.000000e+00 : f32
    %15 = vector.broadcast %cst_13 : f32 to vector<1x128xf32>
    %16 = arith.maximumf %14, %15 : vector<1x128xf32>
    %cst_14 = arith.constant 9.99999974E-6 : f32
    %17 = vector.broadcast %cst_14 : f32 to vector<1x128xf32>
    %18 = arith.addf %16, %17 : vector<1x128xf32>
    %19 = math.rsqrt %18 : vector<1x128xf32>
    %20 = arith.mulf %3, %19 : vector<1x128xf32>
    %21 = arith.mulf %11, %20 : vector<1x128xf32>
    %22 = arith.subf %4, %21 : vector<1x128xf32>
    %23 = vector.broadcast %20 : vector<1x128xf32> to vector<2x128xf32>
    %24 = arith.mulf %5, %23 : vector<2x128xf32>
    %25 = vector.broadcast %22 : vector<1x128xf32> to vector<2x128xf32>
    %26 = arith.addf %24, %25 : vector<2x128xf32>
    %cst_15 = arith.constant 0.000000e+00 : f32
    %27 = vector.broadcast %cst_15 : f32 to vector<2x128xf32>
    %28 = arith.cmpf oge, %26, %27 : vector<2x128xf32>
    %cst_16 = arith.constant 2.000000e-01 : f32
    %29 = vector.broadcast %cst_16 : f32 to vector<2x128xf32>
    %30 = arith.mulf %29, %26 : vector<2x128xf32>
    %31 = arith.select %28, %26, %30 : vector<2x128xi1>, vector<2x128xf32>
    %32 = arith.truncf %31 : vector<2x128xf32> to vector<2x128xbf16>
    %c0_17 = arith.constant 0 : index
    %c0_18 = arith.constant 0 : index
    %33 = vector.load %arg6[%c0_17, %c0_18] : memref<128x128xbf16, #tpu.memory_space<vmem>>, vector<128x128xbf16>
    %c0_19 = arith.constant 0 : index
    %c0_20 = arith.constant 0 : index
    %34 = vector.load %arg7[%c0_19, %c0_20] : memref<128x128xf32, #tpu.memory_space<vmem>>, vector<128x128xf32>
    %c0_21 = arith.constant 0 : index
    %c0_22 = arith.constant 0 : index
    %35 = vector.load %arg8[%c0_21, %c0_22] : memref<1x128xf32, #tpu.memory_space<vmem>>, vector<1x128xf32>
    %c0_23 = arith.constant 0 : index
    %c0_24 = arith.constant 0 : index
    %36 = vector.load %arg9[%c0_23, %c0_24] : memref<1x128xf32, #tpu.memory_space<vmem>>, vector<1x128xf32>
    %cst_25 = arith.constant dense<0.000000e+00> : vector<2x128xf32>
    %37 = tpu.matmul %32, %33, %cst_25 {dimension_numbers = #tpu.dot_dimension_numbers<[1], [0], [0], [1], [0, 0, 1, 1], [], []>} : vector<2x128xbf16>, vector<128x128xbf16>, vector<2x128xf32> -> vector<2x128xf32>
    %cst_26 = arith.constant dense<0.000000e+00> : vector<128xf32>
    %38 = vector.multi_reduction <add>, %37, %cst_26 [0] : vector<2x128xf32> to vector<128xf32>
    %39 = vector.shape_cast %38 : vector<128xf32> to vector<1x128xf32>
    %40 = arith.mulf %37, %37 : vector<2x128xf32>
    %cst_27 = arith.constant dense<0.000000e+00> : vector<128xf32>
    %41 = vector.multi_reduction <add>, %40, %cst_27 [0] : vector<2x128xf32> to vector<128xf32>
    %42 = vector.shape_cast %41 : vector<128xf32> to vector<1x128xf32>
    %cst_28 = arith.constant dense<0.000000e+00> : vector<1x128xf32>
    %43 = tpu.matmul %39, %34, %cst_28 {dimension_numbers = #tpu.dot_dimension_numbers<[1], [0], [0], [1], [0, 0, 1, 1], [], []>} : vector<1x128xf32>, vector<128x128xf32>, vector<1x128xf32> -> vector<1x128xf32>
    %cst_29 = arith.constant dense<0.000000e+00> : vector<1x128xf32>
    %44 = tpu.matmul %42, %34, %cst_29 {dimension_numbers = #tpu.dot_dimension_numbers<[1], [0], [0], [1], [0, 0, 1, 1], [], []>} : vector<1x128xf32>, vector<128x128xf32>, vector<1x128xf32> -> vector<1x128xf32>
    %45 = arith.mulf %43, %43 : vector<1x128xf32>
    %46 = arith.subf %44, %45 : vector<1x128xf32>
    %cst_30 = arith.constant 0.000000e+00 : f32
    %47 = vector.broadcast %cst_30 : f32 to vector<1x128xf32>
    %48 = arith.maximumf %46, %47 : vector<1x128xf32>
    %cst_31 = arith.constant 9.99999974E-6 : f32
    %49 = vector.broadcast %cst_31 : f32 to vector<1x128xf32>
    %50 = arith.addf %48, %49 : vector<1x128xf32>
    %51 = math.rsqrt %50 : vector<1x128xf32>
    %52 = arith.mulf %35, %51 : vector<1x128xf32>
    %53 = arith.mulf %43, %52 : vector<1x128xf32>
    %54 = arith.subf %36, %53 : vector<1x128xf32>
    %55 = vector.broadcast %52 : vector<1x128xf32> to vector<2x128xf32>
    %56 = arith.mulf %37, %55 : vector<2x128xf32>
    %57 = vector.broadcast %54 : vector<1x128xf32> to vector<2x128xf32>
    %58 = arith.addf %56, %57 : vector<2x128xf32>
    %cst_32 = arith.constant 0.000000e+00 : f32
    %59 = vector.broadcast %cst_32 : f32 to vector<2x128xf32>
    %60 = arith.cmpf oge, %58, %59 : vector<2x128xf32>
    %cst_33 = arith.constant 2.000000e-01 : f32
    %61 = vector.broadcast %cst_33 : f32 to vector<2x128xf32>
    %62 = arith.mulf %61, %58 : vector<2x128xf32>
    %63 = arith.select %60, %58, %62 : vector<2x128xi1>, vector<2x128xf32>
    %64 = arith.truncf %63 : vector<2x128xf32> to vector<2x128xbf16>
    %c0_34 = arith.constant 0 : index
    %c0_35 = arith.constant 0 : index
    %65 = vector.load %arg10[%c0_34, %c0_35] : memref<128x128xbf16, #tpu.memory_space<vmem>>, vector<128x128xbf16>
    %c0_36 = arith.constant 0 : index
    %c0_37 = arith.constant 0 : index
    %66 = vector.load %arg11[%c0_36, %c0_37] : memref<128x128xf32, #tpu.memory_space<vmem>>, vector<128x128xf32>
    %c0_38 = arith.constant 0 : index
    %c0_39 = arith.constant 0 : index
    %67 = vector.load %arg12[%c0_38, %c0_39] : memref<1x128xf32, #tpu.memory_space<vmem>>, vector<1x128xf32>
    %c0_40 = arith.constant 0 : index
    %c0_41 = arith.constant 0 : index
    %68 = vector.load %arg13[%c0_40, %c0_41] : memref<1x128xf32, #tpu.memory_space<vmem>>, vector<1x128xf32>
    %cst_42 = arith.constant dense<0.000000e+00> : vector<2x128xf32>
    %69 = tpu.matmul %64, %65, %cst_42 {dimension_numbers = #tpu.dot_dimension_numbers<[1], [0], [0], [1], [0, 0, 1, 1], [], []>} : vector<2x128xbf16>, vector<128x128xbf16>, vector<2x128xf32> -> vector<2x128xf32>
    %cst_43 = arith.constant dense<0.000000e+00> : vector<128xf32>
    %70 = vector.multi_reduction <add>, %69, %cst_43 [0] : vector<2x128xf32> to vector<128xf32>
    %71 = vector.shape_cast %70 : vector<128xf32> to vector<1x128xf32>
    %72 = arith.mulf %69, %69 : vector<2x128xf32>
    %cst_44 = arith.constant dense<0.000000e+00> : vector<128xf32>
    %73 = vector.multi_reduction <add>, %72, %cst_44 [0] : vector<2x128xf32> to vector<128xf32>
    %74 = vector.shape_cast %73 : vector<128xf32> to vector<1x128xf32>
    %cst_45 = arith.constant dense<0.000000e+00> : vector<1x128xf32>
    %75 = tpu.matmul %71, %66, %cst_45 {dimension_numbers = #tpu.dot_dimension_numbers<[1], [0], [0], [1], [0, 0, 1, 1], [], []>} : vector<1x128xf32>, vector<128x128xf32>, vector<1x128xf32> -> vector<1x128xf32>
    %cst_46 = arith.constant dense<0.000000e+00> : vector<1x128xf32>
    %76 = tpu.matmul %74, %66, %cst_46 {dimension_numbers = #tpu.dot_dimension_numbers<[1], [0], [0], [1], [0, 0, 1, 1], [], []>} : vector<1x128xf32>, vector<128x128xf32>, vector<1x128xf32> -> vector<1x128xf32>
    %77 = arith.mulf %75, %75 : vector<1x128xf32>
    %78 = arith.subf %76, %77 : vector<1x128xf32>
    %cst_47 = arith.constant 0.000000e+00 : f32
    %79 = vector.broadcast %cst_47 : f32 to vector<1x128xf32>
    %80 = arith.maximumf %78, %79 : vector<1x128xf32>
    %cst_48 = arith.constant 9.99999974E-6 : f32
    %81 = vector.broadcast %cst_48 : f32 to vector<1x128xf32>
    %82 = arith.addf %80, %81 : vector<1x128xf32>
    %83 = math.rsqrt %82 : vector<1x128xf32>
    %84 = arith.mulf %67, %83 : vector<1x128xf32>
    %85 = arith.mulf %75, %84 : vector<1x128xf32>
    %86 = arith.subf %68, %85 : vector<1x128xf32>
    %87 = vector.broadcast %84 : vector<1x128xf32> to vector<2x128xf32>
    %88 = arith.mulf %69, %87 : vector<2x128xf32>
    %89 = vector.broadcast %86 : vector<1x128xf32> to vector<2x128xf32>
    %90 = arith.addf %88, %89 : vector<2x128xf32>
    %cst_49 = arith.constant 0.000000e+00 : f32
    %91 = vector.broadcast %cst_49 : f32 to vector<2x128xf32>
    %92 = arith.cmpf oge, %90, %91 : vector<2x128xf32>
    %cst_50 = arith.constant 2.000000e-01 : f32
    %93 = vector.broadcast %cst_50 : f32 to vector<2x128xf32>
    %94 = arith.mulf %93, %90 : vector<2x128xf32>
    %95 = arith.select %92, %90, %94 : vector<2x128xi1>, vector<2x128xf32>
    %96 = arith.truncf %95 : vector<2x128xf32> to vector<2x128xbf16>
    %c0_51 = arith.constant 0 : index
    %c0_52 = arith.constant 0 : index
    %97 = vector.load %arg14[%c0_51, %c0_52] : memref<128x128xbf16, #tpu.memory_space<vmem>>, vector<128x128xbf16>
    %c0_53 = arith.constant 0 : index
    %c0_54 = arith.constant 0 : index
    %98 = vector.load %arg15[%c0_53, %c0_54] : memref<128x128xf32, #tpu.memory_space<vmem>>, vector<128x128xf32>
    %c0_55 = arith.constant 0 : index
    %c0_56 = arith.constant 0 : index
    %99 = vector.load %arg16[%c0_55, %c0_56] : memref<1x128xf32, #tpu.memory_space<vmem>>, vector<1x128xf32>
    %c0_57 = arith.constant 0 : index
    %c0_58 = arith.constant 0 : index
    %100 = vector.load %arg17[%c0_57, %c0_58] : memref<1x128xf32, #tpu.memory_space<vmem>>, vector<1x128xf32>
    %cst_59 = arith.constant dense<0.000000e+00> : vector<2x128xf32>
    %101 = tpu.matmul %96, %97, %cst_59 {dimension_numbers = #tpu.dot_dimension_numbers<[1], [0], [0], [1], [0, 0, 1, 1], [], []>} : vector<2x128xbf16>, vector<128x128xbf16>, vector<2x128xf32> -> vector<2x128xf32>
    %cst_60 = arith.constant dense<0.000000e+00> : vector<128xf32>
    %102 = vector.multi_reduction <add>, %101, %cst_60 [0] : vector<2x128xf32> to vector<128xf32>
    %103 = vector.shape_cast %102 : vector<128xf32> to vector<1x128xf32>
    %104 = arith.mulf %101, %101 : vector<2x128xf32>
    %cst_61 = arith.constant dense<0.000000e+00> : vector<128xf32>
    %105 = vector.multi_reduction <add>, %104, %cst_61 [0] : vector<2x128xf32> to vector<128xf32>
    %106 = vector.shape_cast %105 : vector<128xf32> to vector<1x128xf32>
    %cst_62 = arith.constant dense<0.000000e+00> : vector<1x128xf32>
    %107 = tpu.matmul %103, %98, %cst_62 {dimension_numbers = #tpu.dot_dimension_numbers<[1], [0], [0], [1], [0, 0, 1, 1], [], []>} : vector<1x128xf32>, vector<128x128xf32>, vector<1x128xf32> -> vector<1x128xf32>
    %cst_63 = arith.constant dense<0.000000e+00> : vector<1x128xf32>
    %108 = tpu.matmul %106, %98, %cst_63 {dimension_numbers = #tpu.dot_dimension_numbers<[1], [0], [0], [1], [0, 0, 1, 1], [], []>} : vector<1x128xf32>, vector<128x128xf32>, vector<1x128xf32> -> vector<1x128xf32>
    %109 = arith.mulf %107, %107 : vector<1x128xf32>
    %110 = arith.subf %108, %109 : vector<1x128xf32>
    %cst_64 = arith.constant 0.000000e+00 : f32
    %111 = vector.broadcast %cst_64 : f32 to vector<1x128xf32>
    %112 = arith.maximumf %110, %111 : vector<1x128xf32>
    %cst_65 = arith.constant 9.99999974E-6 : f32
    %113 = vector.broadcast %cst_65 : f32 to vector<1x128xf32>
    %114 = arith.addf %112, %113 : vector<1x128xf32>
    %115 = math.rsqrt %114 : vector<1x128xf32>
    %116 = arith.mulf %99, %115 : vector<1x128xf32>
    %117 = arith.mulf %107, %116 : vector<1x128xf32>
    %118 = arith.subf %100, %117 : vector<1x128xf32>
    %119 = vector.broadcast %116 : vector<1x128xf32> to vector<2x128xf32>
    %120 = arith.mulf %101, %119 : vector<2x128xf32>
    %121 = vector.broadcast %118 : vector<1x128xf32> to vector<2x128xf32>
    %122 = arith.addf %120, %121 : vector<2x128xf32>
    %cst_66 = arith.constant 0.000000e+00 : f32
    %123 = vector.broadcast %cst_66 : f32 to vector<2x128xf32>
    %124 = arith.cmpf oge, %122, %123 : vector<2x128xf32>
    %cst_67 = arith.constant 2.000000e-01 : f32
    %125 = vector.broadcast %cst_67 : f32 to vector<2x128xf32>
    %126 = arith.mulf %125, %122 : vector<2x128xf32>
    %127 = arith.select %124, %122, %126 : vector<2x128xi1>, vector<2x128xf32>
    %c0_68 = arith.constant 0 : index
    %c0_69 = arith.constant 0 : index
    %128 = vector.load %arg21[%c0_68, %c0_69] : memref<2x128xf32, #tpu.memory_space<vmem>>, vector<2x128xf32>
    tpu.vector_store %arg21[%c0_68, %c0_69], %127 {strides = array<i32>} : memref<2x128xf32, #tpu.memory_space<vmem>>, vector<2x128xf32>,
    %c0_70 = arith.constant 0 : index
    %c0_71 = arith.constant 0 : index
    %129 = vector.load %arg18[%c0_70, %c0_71] : memref<128x1xf32, #tpu.memory_space<vmem>>, vector<128x1xf32>
    %cst_72 = arith.constant dense<0.000000e+00> : vector<2x1xf32>
    %130 = tpu.matmul %127, %129, %cst_72 {dimension_numbers = #tpu.dot_dimension_numbers<[1], [0], [0], [1], [0, 0, 1, 1], [], []>} : vector<2x128xf32>, vector<128x1xf32>, vector<2x1xf32> -> vector<2x1xf32>
    %c0_73 = arith.constant 0 : index
    %c0_74 = arith.constant 0 : index
    %131 = vector.load %arg19[%c0_73, %c0_74] : memref<1x1xf32, #tpu.memory_space<vmem>>, vector<1x1xf32>
    %132 = vector.broadcast %131 : vector<1x1xf32> to vector<2x1xf32>
    %133 = arith.addf %130, %132 : vector<2x1xf32>
    %134 = arith.negf %133 : vector<2x1xf32>
    %135 = math.exp %134 : vector<2x1xf32>
    %cst_75 = arith.constant 1.000000e+00 : f32
    %136 = vector.broadcast %cst_75 : f32 to vector<2x1xf32>
    %137 = arith.addf %136, %135 : vector<2x1xf32>
    %138 = arith.divf %136, %137 : vector<2x1xf32>
    %c0_76 = arith.constant 0 : index
    %c0_77 = arith.constant 0 : index
    %139 = vector.load %arg20[%c0_76, %c0_77] : memref<2x1xf32, #tpu.memory_space<vmem>>, vector<2x1xf32>
    tpu.vector_store %arg20[%c0_76, %c0_77], %138 {strides = array<i32>} : memref<2x1xf32, #tpu.memory_space<vmem>>, vector<2x1xf32>,
    return
  }
  func.func @transform_0(%arg0: i32) -> (i32, i32) {
    %c0_i32 = arith.constant 0 : i32
    %c0_i32_0 = arith.constant 0 : i32
    %c0_i32_1 = arith.constant 0 : i32
    return %c0_i32, %c0_i32_0 : i32, i32
  }
  func.func @transform_1(%arg0: i32) -> (i32, i32) {
    %c0_i32 = arith.constant 0 : i32
    %c0_i32_0 = arith.constant 0 : i32
    %c0_i32_1 = arith.constant 0 : i32
    return %c0_i32, %c0_i32_0 : i32, i32
  }
  func.func @transform_2(%arg0: i32) -> (i32, i32) {
    %c0_i32 = arith.constant 0 : i32
    %c0_i32_0 = arith.constant 0 : i32
    %c0_i32_1 = arith.constant 0 : i32
    return %c0_i32, %c0_i32_0 : i32, i32
  }
  func.func @transform_3(%arg0: i32) -> (i32, i32) {
    %c0_i32 = arith.constant 0 : i32
    %c0_i32_0 = arith.constant 0 : i32
    %c0_i32_1 = arith.constant 0 : i32
    return %c0_i32, %c0_i32_0 : i32, i32
  }
  func.func @transform_4(%arg0: i32) -> (i32, i32) {
    %c0_i32 = arith.constant 0 : i32
    %c0_i32_0 = arith.constant 0 : i32
    %c0_i32_1 = arith.constant 0 : i32
    return %c0_i32, %c0_i32_0 : i32, i32
  }
  func.func @transform_5(%arg0: i32) -> (i32, i32) {
    %c0_i32 = arith.constant 0 : i32
    %c0_i32_0 = arith.constant 0 : i32
    %c0_i32_1 = arith.constant 0 : i32
    return %c0_i32, %c0_i32_0 : i32, i32
  }
  func.func @transform_6(%arg0: i32) -> (i32, i32) {
    %c0_i32 = arith.constant 0 : i32
    %c0_i32_0 = arith.constant 0 : i32
    %c0_i32_1 = arith.constant 0 : i32
    return %c0_i32, %c0_i32_0 : i32, i32
  }
  func.func @transform_7(%arg0: i32) -> (i32, i32) {
    %c0_i32 = arith.constant 0 : i32
    %c0_i32_0 = arith.constant 0 : i32
    %c0_i32_1 = arith.constant 0 : i32
    return %c0_i32, %c0_i32_0 : i32, i32
  }
  func.func @transform_8(%arg0: i32) -> (i32, i32) {
    %c0_i32 = arith.constant 0 : i32
    %c0_i32_0 = arith.constant 0 : i32
    %c0_i32_1 = arith.constant 0 : i32
    return %c0_i32, %c0_i32_0 : i32, i32
  }
  func.func @transform_9(%arg0: i32) -> (i32, i32) {
    %c0_i32 = arith.constant 0 : i32
    %c0_i32_0 = arith.constant 0 : i32
    %c0_i32_1 = arith.constant 0 : i32
    return %c0_i32, %c0_i32_0 : i32, i32
  }
  func.func @transform_10(%arg0: i32) -> (i32, i32) {
    %c0_i32 = arith.constant 0 : i32
    %c0_i32_0 = arith.constant 0 : i32
    %c0_i32_1 = arith.constant 0 : i32
    return %c0_i32, %c0_i32_0 : i32, i32
  }
  func.func @transform_11(%arg0: i32) -> (i32, i32) {
    %c0_i32 = arith.constant 0 : i32
    %c0_i32_0 = arith.constant 0 : i32
    %c0_i32_1 = arith.constant 0 : i32
    return %c0_i32, %c0_i32_0 : i32, i32
  }
  func.func @transform_12(%arg0: i32) -> (i32, i32) {
    %c0_i32 = arith.constant 0 : i32
    %c0_i32_0 = arith.constant 0 : i32
    %c0_i32_1 = arith.constant 0 : i32
    return %c0_i32, %c0_i32_0 : i32, i32
  }
  func.func @transform_13(%arg0: i32) -> (i32, i32) {
    %c0_i32 = arith.constant 0 : i32
    %c0_i32_0 = arith.constant 0 : i32
    %c0_i32_1 = arith.constant 0 : i32
    return %c0_i32, %c0_i32_0 : i32, i32
  }
  func.func @transform_14(%arg0: i32) -> (i32, i32) {
    %c0_i32 = arith.constant 0 : i32
    %c0_i32_0 = arith.constant 0 : i32
    %c0_i32_1 = arith.constant 0 : i32
    return %c0_i32, %c0_i32_0 : i32, i32
  }
  func.func @transform_15(%arg0: i32) -> (i32, i32) {
    %c0_i32 = arith.constant 0 : i32
    %c0_i32_0 = arith.constant 0 : i32
    %c0_i32_1 = arith.constant 0 : i32
    return %c0_i32, %c0_i32_0 : i32, i32
  }
  func.func @transform_16(%arg0: i32) -> (i32, i32) {
    %c0_i32 = arith.constant 0 : i32
    %c0_i32_0 = arith.constant 0 : i32
    %c0_i32_1 = arith.constant 0 : i32
    return %c0_i32, %c0_i32_0 : i32, i32
  }
  func.func @transform_17(%arg0: i32) -> (i32, i32) {
    %c0_i32 = arith.constant 0 : i32
    %c0_i32_0 = arith.constant 0 : i32
    %c0_i32_1 = arith.constant 0 : i32
    return %c0_i32, %c0_i32_0 : i32, i32
  }
  func.func @transform_18(%arg0: i32) -> (i32, i32) {
    %c0_i32 = arith.constant 0 : i32
    %c0_i32_0 = arith.constant 0 : i32
    %c0_i32_1 = arith.constant 0 : i32
    return %c0_i32, %c0_i32_0 : i32, i32
  }
  func.func @transform_19(%arg0: i32) -> (i32, i32) {
    %c0_i32 = arith.constant 0 : i32
    %c0_i32_0 = arith.constant 0 : i32
    %c0_i32_1 = arith.constant 0 : i32
    return %c0_i32, %c0_i32_0 : i32, i32
  }
  func.func @transform_20(%arg0: i32) -> (i32, i32) {
    %c0_i32 = arith.constant 0 : i32
    %c0_i32_0 = arith.constant 0 : i32
    %c0_i32_1 = arith.constant 0 : i32
    return %c0_i32, %c0_i32_0 : i32, i32
  }
}

</mosaic_0001>

<llo_original>
// kernel: disc_forward.1
$region0: #{disc_forward.1}
  #allocation0 [shape = 'u32[]', space=smem, size = 0x4, offset = 0x4, fixed_abs, tag = 'smem constant byte address 0x4 - core index']
  #allocation1 [shape = 'u32[72,128]{1,0:T(1,128)}', space=vmem, size = 0x9000, scoped, tag = 'internal scratch']
  #allocation2 [shape = 'f32[1,1]{1,0:T(1,128)S(1)}', space=vmem, size = 0x200, scoped, tag = 'scoped memory for disc_forward.1']
  %s0 = inlined_call_operand.vmem [shape: bf16[2,128], index: 0, kind: input, shape index: {}]
  %s1 = inlined_call_operand.vmem [shape: bf16[128,128], index: 1, kind: input, shape index: {}]
  %s2 = inlined_call_operand.vmem [shape: f32[128,128], index: 2, kind: input, shape index: {}]
  %s3 = inlined_call_operand.vmem [shape: f32[1,128], index: 3, kind: input, shape index: {}]
  %s4 = inlined_call_operand.vmem [shape: f32[1,128], index: 4, kind: input, shape index: {}]
  %s5 = inlined_call_operand.vmem [shape: bf16[128,128], index: 5, kind: input, shape index: {}]
  %s6 = inlined_call_operand.vmem [shape: f32[128,128], index: 6, kind: input, shape index: {}]
  %s7 = inlined_call_operand.vmem [shape: f32[1,128], index: 7, kind: input, shape index: {}]
  %s8 = inlined_call_operand.vmem [shape: f32[1,128], index: 8, kind: input, shape index: {}]
  %s9 = inlined_call_operand.vmem [shape: bf16[128,128], index: 9, kind: input, shape index: {}]
  %s10 = inlined_call_operand.vmem [shape: f32[128,128], index: 10, kind: input, shape index: {}]
  %s11 = inlined_call_operand.vmem [shape: f32[1,128], index: 11, kind: input, shape index: {}]
  %s12 = inlined_call_operand.vmem [shape: f32[1,128], index: 12, kind: input, shape index: {}]
  %s13 = inlined_call_operand.vmem [shape: bf16[128,128], index: 13, kind: input, shape index: {}]
  %s14 = inlined_call_operand.vmem [shape: f32[128,128], index: 14, kind: input, shape index: {}]
  %s15 = inlined_call_operand.vmem [shape: f32[1,128], index: 15, kind: input, shape index: {}]
  %s16 = inlined_call_operand.vmem [shape: f32[1,128], index: 16, kind: input, shape index: {}]
  %s17 = inlined_call_operand.vmem [shape: f32[128,1], index: 17, kind: input, shape index: {}]
  %s18 = inlined_call_operand.<no memory space> [shape: f32[1,1], index: 18, kind: input, shape index: {}]
  %s19 = inlined_call_operand.vmem [shape: f32[2,1], index: 19, kind: output, shape index: {0}]
  %s20 = inlined_call_operand.hbm [shape: f32[2,128], index: 20, kind: output, shape index: {1}]
  %21 = xla_tuple %s19, %s20
  %s22 = sld [smem:[#allocation0]]
  $region94: #{disc_forward.1} parent=0
    _
  %s24 = ssub.s32 1, %s22
  %s25 = scalar_select 0, %s24, %s22
  %v26 = vstv %s18
  %27 = vst [vmem:[#allocation2] sm:$0x1] %v26
  $region1: #{disc_forward.1} parent=0
    #allocation3 [shape = 'u8[1024]{0}', space=vmem, size = 0x400, scoped, tag = 'output window, operand 1, single buffered']
    #allocation4 [shape = 's32[1]{0}', space=sflag, size = 0x4, scoped, tag = 'scoped memory for disc_forward.1']
    %28 = vsyncpa [#allocation4], 0
    // Predicated region
    $region2: #{disc_forward.1} parent=1 // pred_check
      _
    $region3: #{disc_forward.1} parent=1 // pred_check_branch
      %30 = sbr.rel (0) target = $region5
    $region4: #{disc_forward.1} parent=1 // pred_region
      _
    $region5: #{disc_forward.1} parent=1 // pred_fallthru
      _
    // Predicated region
    $region6: #{disc_forward.1} parent=1 // pred_check
      _
    $region7: #{disc_forward.1} parent=1 // pred_check_branch
      %32 = sbr.rel (0) target = $region9
    $region8: #{disc_forward.1} parent=1 // pred_region
      _
    $region9: #{disc_forward.1} parent=1 // pred_fallthru
      _
    // Predicated region
    $region10: #{disc_forward.1} parent=1 // pred_check
      _
    $region11: #{disc_forward.1} parent=1 // pred_check_branch
      %34 = sbr.rel (0) target = $region13
    $region12: #{disc_forward.1} parent=1 // pred_region
      _
    $region13: #{disc_forward.1} parent=1 // pred_fallthru
      _
    // Predicated region
    $region14: #{disc_forward.1} parent=1 // pred_check
      _
    $region15: #{disc_forward.1} parent=1 // pred_check_branch
      %36 = sbr.rel (0) target = $region17
    $region16: #{disc_forward.1} parent=1 // pred_region
      _
    $region17: #{disc_forward.1} parent=1 // pred_fallthru
      _
    // Predicated region
    $region18: #{disc_forward.1} parent=1 // pred_check
      _
    $region19: #{disc_forward.1} parent=1 // pred_check_branch
      %38 = sbr.rel (0) target = $region21
    $region20: #{disc_forward.1} parent=1 // pred_region
      _
    $region21: #{disc_forward.1} parent=1 // pred_fallthru
      _
    // Predicated region
    $region22: #{disc_forward.1} parent=1 // pred_check
      _
    $region23: #{disc_forward.1} parent=1 // pred_check_branch
      %40 = sbr.rel (0) target = $region25
    $region24: #{disc_forward.1} parent=1 // pred_region
      _
    $region25: #{disc_forward.1} parent=1 // pred_fallthru
      _
    // Predicated region
    $region26: #{disc_forward.1} parent=1 // pred_check
      _
    $region27: #{disc_forward.1} parent=1 // pred_check_branch
      %42 = sbr.rel (0) target = $region29
    $region28: #{disc_forward.1} parent=1 // pred_region
      _
    $region29: #{disc_forward.1} parent=1 // pred_fallthru
      _
    // Predicated region
    $region30: #{disc_forward.1} parent=1 // pred_check
      _
    $region31: #{disc_forward.1} parent=1 // pred_check_branch
      %44 = sbr.rel (0) target = $region33
    $region32: #{disc_forward.1} parent=1 // pred_region
      _
    $region33: #{disc_forward.1} parent=1 // pred_fallthru
      _
    // Predicated region
    $region34: #{disc_forward.1} parent=1 // pred_check
      _
    $region35: #{disc_forward.1} parent=1 // pred_check_branch
      %46 = sbr.rel (0) target = $region37
    $region36: #{disc_forward.1} parent=1 // pred_region
      _
    $region37: #{disc_forward.1} parent=1 // pred_fallthru
      _
    // Predicated region
    $region38: #{disc_forward.1} parent=1 // pred_check
      _
    $region39: #{disc_forward.1} parent=1 // pred_check_branch
      %48 = sbr.rel (0) target = $region41
    $region40: #{disc_forward.1} parent=1 // pred_region
      _
    $region41: #{disc_forward.1} parent=1 // pred_fallthru
      _
    // Predicated region
    $region42: #{disc_forward.1} parent=1 // pred_check
      _
    $region43: #{disc_forward.1} parent=1 // pred_check_branch
      %50 = sbr.rel (0) target = $region45
    $region44: #{disc_forward.1} parent=1 // pred_region
      _
    $region45: #{disc_forward.1} parent=1 // pred_fallthru
      _
    // Predicated region
    $region46: #{disc_forward.1} parent=1 // pred_check
      _
    $region47: #{disc_forward.1} parent=1 // pred_check_branch
      %52 = sbr.rel (0) target = $region49
    $region48: #{disc_forward.1} parent=1 // pred_region
      _
    $region49: #{disc_forward.1} parent=1 // pred_fallthru
      _
    // Predicated region
    $region50: #{disc_forward.1} parent=1 // pred_check
      _
    $region51: #{disc_forward.1} parent=1 // pred_check_branch
      %54 = sbr.rel (0) target = $region53
    $region52: #{disc_forward.1} parent=1 // pred_region
      _
    $region53: #{disc_forward.1} parent=1 // pred_fallthru
      _
    // Predicated region
    $region54: #{disc_forward.1} parent=1 // pred_check
      _
    $region55: #{disc_forward.1} parent=1 // pred_check_branch
      %56 = sbr.rel (0) target = $region57
    $region56: #{disc_forward.1} parent=1 // pred_region
      _
    $region57: #{disc_forward.1} parent=1 // pred_fallthru
      _
    // Predicated region
    $region58: #{disc_forward.1} parent=1 // pred_check
      _
    $region59: #{disc_forward.1} parent=1 // pred_check_branch
      %58 = sbr.rel (0) target = $region61
    $region60: #{disc_forward.1} parent=1 // pred_region
      _
    $region61: #{disc_forward.1} parent=1 // pred_fallthru
      _
    // Predicated region
    $region62: #{disc_forward.1} parent=1 // pred_check
      _
    $region63: #{disc_forward.1} parent=1 // pred_check_branch
      %60 = sbr.rel (0) target = $region65
    $region64: #{disc_forward.1} parent=1 // pred_region
      _
    $region65: #{disc_forward.1} parent=1 // pred_fallthru
      _
    // Predicated region
    $region66: #{disc_forward.1} parent=1 // pred_check
      _
    $region67: #{disc_forward.1} parent=1 // pred_check_branch
      %62 = sbr.rel (0) target = $region69
    $region68: #{disc_forward.1} parent=1 // pred_region
      _
    $region69: #{disc_forward.1} parent=1 // pred_fallthru
      _
    // Predicated region
    $region70: #{disc_forward.1} parent=1 // pred_check
      _
    $region71: #{disc_forward.1} parent=1 // pred_check_branch
      %64 = sbr.rel (0) target = $region73
    $region72: #{disc_forward.1} parent=1 // pred_region
      _
    $region73: #{disc_forward.1} parent=1 // pred_fallthru
      _
    // Predicated region
    $region74: #{disc_forward.1} parent=1 // pred_check
      _
    $region75: #{disc_forward.1} parent=1 // pred_check_branch
      %66 = sbr.rel (0) target = $region77
    $region76: #{disc_forward.1} parent=1 // pred_region
      _
    $region77: #{disc_forward.1} parent=1 // pred_fallthru
      _
    %v67 = vld [vmem:[%s0] sm:$0x1]
    %v68 = vld [vmem:[%s1] sm:$0xf]
    %v69 = vld [vmem:[%s1 + $0x4] sm:$0xf]
    %v70 = vld [vmem:[%s1 + $0x8] sm:$0xf]
    %v71 = vld [vmem:[%s1 + $0xc] sm:$0xf]
    %v72 = vld [vmem:[%s1 + $0x10] sm:$0xf]
    %v73 = vld [vmem:[%s1 + $0x14] sm:$0xf]
    %v74 = vld [vmem:[%s1 + $0x18] sm:$0xf]
    %v75 = vld [vmem:[%s1 + $0x1c] sm:$0xf]
    %v76 = vld [vmem:[%s1 + $0x20] sm:$0xf]
    %v77 = vld [vmem:[%s1 + $0x24] sm:$0xf]
    %v78 = vld [vmem:[%s1 + $0x28] sm:$0xf]
    %v79 = vld [vmem:[%s1 + $0x2c] sm:$0xf]
    %v80 = vld [vmem:[%s1 + $0x30] sm:$0xf]
    %v81 = vld [vmem:[%s1 + $0x34] sm:$0xf]
    %v82 = vld [vmem:[%s1 + $0x38] sm:$0xf]
    %v83 = vld [vmem:[%s1 + $0x3c] sm:$0xf]
    %v84 = vld [vmem:[%s2] sm:$0xff]
    %v85 = vld [vmem:[%s2 + $0x8] sm:$0xff]
    %v86 = vld [vmem:[%s2 + $0x10] sm:$0xff]
    %v87 = vld [vmem:[%s2 + $0x18] sm:$0xff]
    %v88 = vld [vmem:[%s2 + $0x20] sm:$0xff]
    %v89 = vld [vmem:[%s2 + $0x28] sm:$0xff]
    %v90 = vld [vmem:[%s2 + $0x30] sm:$0xff]
    %v91 = vld [vmem:[%s2 + $0x38] sm:$0xff]
    %v92 = vld [vmem:[%s2 + $0x40] sm:$0xff]
    %v93 = vld [vmem:[%s2 + $0x48] sm:$0xff]
    %v94 = vld [vmem:[%s2 + $0x50] sm:$0xff]
    %v95 = vld [vmem:[%s2 + $0x58] sm:$0xff]
    %v96 = vld [vmem:[%s2 + $0x60] sm:$0xff]
    %v97 = vld [vmem:[%s2 + $0x68] sm:$0xff]
    %v98 = vld [vmem:[%s2 + $0x70] sm:$0xff]
    %v99 = vld [vmem:[%s2 + $0x78] sm:$0xff]
    %v100 = vld [vmem:[%s3] sm:$0x1]
    %v101 = vld [vmem:[%s4] sm:$0x1]
    %v118 = vunpack.c.l.b16 %v68
    %v119 = vunpack.c.l.b16 %v69
    %v120 = vunpack.c.l.b16 %v70
    %v121 = vunpack.c.l.b16 %v71
    %v122 = vunpack.c.l.b16 %v72
    %v123 = vunpack.c.l.b16 %v73
    %v124 = vunpack.c.l.b16 %v74
    %v125 = vunpack.c.l.b16 %v75
    %v126 = vunpack.c.l.b16 %v76
    %v127 = vunpack.c.l.b16 %v77
    %v128 = vunpack.c.l.b16 %v78
    %v129 = vunpack.c.l.b16 %v79
    %v130 = vunpack.c.l.b16 %v80
    %v131 = vunpack.c.l.b16 %v81
    %v132 = vunpack.c.l.b16 %v82
    %v133 = vunpack.c.l.b16 %v83
    %v134 = vpack.c.b16 %v119, %v118
    %v135 = vpack.c.b16 %v121, %v120
    %v136 = vpack.c.b16 %v123, %v122
    %v137 = vpack.c.b16 %v125, %v124
    %v138 = vpack.c.b16 %v127, %v126
    %v139 = vpack.c.b16 %v129, %v128
    %v140 = vpack.c.b16 %v131, %v130
    %v141 = vpack.c.b16 %v133, %v132
    %150 = vmatpush.bf16.msra.mxu0 %v141
    %151 = vmatpush.bf16.msra.mxu0 %v140
    %152 = vmatpush.bf16.msra.mxu0 %v139
    %153 = vmatpush.bf16.msra.mxu0 %v138
    %154 = vmatpush.bf16.msra.mxu0 %v137
    %155 = vmatpush.bf16.msra.mxu0 %v136
    %156 = vmatpush.bf16.msra.mxu0 %v135
    %157 = vmatpush.bf16.msra.mxu0 %v134
    %158 = vmatmul.bf16.gmra.mxu0 %v67
    %v159 = vpop.f32.mrf.mxu0
    %v160 = vadd.f32 0.0, %v159
    %v161 = vpop.f32.mrf.mxu0
    %162 = vdwg.mxu0
    %vm163 = vcmask 1041408
    %v164 = vsel %vm163, %v160, 0.0
    %v165 = vrot.slane %v164, 4
    %v166 = vadd.f32 %v164, %v165
    %v167 = vrot.slane %v166, 2
    %v168 = vadd.f32 %v166, %v167
    %v169 = vrot.slane %v168, 1
    %v170 = vadd.f32 %v168, %v169
    %v171 = vmul.f32 %v160, %v160
    %v172 = vsel %vm163, %v171, 0.0
    %v173 = vrot.slane %v172, 4
    %v174 = vadd.f32 %v172, %v173
    %v175 = vrot.slane %v174, 2
    %v176 = vadd.f32 %v174, %v175
    %v177 = vrot.slane %v176, 1
    %v178 = vadd.f32 %v176, %v177
    %179 = vmatpush.msra.mxu0 %v99
    %180 = vmatpush.msra.mxu0 %v98
    %181 = vmatpush.msra.mxu0 %v97
    %182 = vmatpush.msra.mxu0 %v96
    %183 = vmatpush.msra.mxu0 %v95
    %184 = vmatpush.msra.mxu0 %v94
    %185 = vmatpush.msra.mxu0 %v93
    %186 = vmatpush.msra.mxu0 %v92
    %187 = vmatpush.msra.mxu0 %v91
    %188 = vmatpush.msra.mxu0 %v90
    %189 = vmatpush.msra.mxu0 %v89
    %190 = vmatpush.msra.mxu0 %v88
    %191 = vmatpush.msra.mxu0 %v87
    %192 = vmatpush.msra.mxu0 %v86
    %193 = vmatpush.msra.mxu0 %v85
    %194 = vmatpush.msra.mxu0 %v84
    %195 = vmatmul.f32.gmra.mxu0 %v170
    %v196 = vpop.f32.mrf.mxu0
    %v197 = vadd.f32 0.0, %v196
    %198 = vdwg.mxu0
    %199 = vmatpush.msra.mxu0 %v99
    %200 = vmatpush.msra.mxu0 %v98
    %201 = vmatpush.msra.mxu0 %v97
    %202 = vmatpush.msra.mxu0 %v96
    %203 = vmatpush.msra.mxu0 %v95
    %204 = vmatpush.msra.mxu0 %v94
    %205 = vmatpush.msra.mxu0 %v93
    %206 = vmatpush.msra.mxu0 %v92
    %207 = vmatpush.msra.mxu0 %v91
    %208 = vmatpush.msra.mxu0 %v90
    %209 = vmatpush.msra.mxu0 %v89
    %210 = vmatpush.msra.mxu0 %v88
    %211 = vmatpush.msra.mxu0 %v87
    %212 = vmatpush.msra.mxu0 %v86
    %213 = vmatpush.msra.mxu0 %v85
    %214 = vmatpush.msra.mxu0 %v84
    %215 = vmatmul.f32.gmra.mxu0 %v178
    %v216 = vpop.f32.mrf.mxu0
    %v217 = vadd.f32 0.0, %v216
    %218 = vdwg.mxu0
    %v219 = vmul.f32 %v197, %v197
    %v220 = vsub.f32 %v217, %v219
    %v221 = vmax.f32 %v220, 0.0
    %v222 = vadd.f32 %v221, 1e-05
    %v223 = vrsqrt.pop %v222
    %v224 = vmul.f32 %v223, %v222
    %v225 = vmul.f32 %v224, %v223
    %v226 = vmul.f32 0.5, %v225
    %v227 = vsub.f32 1.5, %v226
    %v228 = vmul.f32 %v223, %v227
    %vm229 = vweird.f32 %v222
    %vm230 = vweird.f32 %v223
    %vm231 = vmor %vm229, %vm230
    %v232 = vsel %vm231, %v223, %v228
    %v233 = vmul.f32 %v100, %v232
    %v234 = vmul.f32 %v197, %v233
    %v235 = vsub.f32 %v101, %v234
    %v237 = vperm.slane %v233, 0
    %v239 = vmul.f32 %v160, %v237
    %v241 = vperm.slane %v235, 0
    %v243 = vadd.f32 %v239, %v241
    %vm244 = vcmp.ge.f32.partialorder %v243, 0.0
    %v245 = vmul.f32 %v243, 0.2
    %v246 = vsel %vm244, %v243, %v245
    %v247 = vpack.c.bf16 %v246, %v246
    %v248 = vld [vmem:[%s5] sm:$0xf]
    %v249 = vld [vmem:[%s5 + $0x4] sm:$0xf]
    %v250 = vld [vmem:[%s5 + $0x8] sm:$0xf]
    %v251 = vld [vmem:[%s5 + $0xc] sm:$0xf]
    %v252 = vld [vmem:[%s5 + $0x10] sm:$0xf]
    %v253 = vld [vmem:[%s5 + $0x14] sm:$0xf]
    %v254 = vld [vmem:[%s5 + $0x18] sm:$0xf]
    %v255 = vld [vmem:[%s5 + $0x1c] sm:$0xf]
    %v256 = vld [vmem:[%s5 + $0x20] sm:$0xf]
    %v257 = vld [vmem:[%s5 + $0x24] sm:$0xf]
    %v258 = vld [vmem:[%s5 + $0x28] sm:$0xf]
    %v259 = vld [vmem:[%s5 + $0x2c] sm:$0xf]
    %v260 = vld [vmem:[%s5 + $0x30] sm:$0xf]
    %v261 = vld [vmem:[%s5 + $0x34] sm:$0xf]
    %v262 = vld [vmem:[%s5 + $0x38] sm:$0xf]
    %v263 = vld [vmem:[%s5 + $0x3c] sm:$0xf]
    %v264 = vld [vmem:[%s6] sm:$0xff]
    %v265 = vld [vmem:[%s6 + $0x8] sm:$0xff]
    %v266 = vld [vmem:[%s6 + $0x10] sm:$0xff]
    %v267 = vld [vmem:[%s6 + $0x18] sm:$0xff]
    %v268 = vld [vmem:[%s6 + $0x20] sm:$0xff]
    %v269 = vld [vmem:[%s6 + $0x28] sm:$0xff]
    %v270 = vld [vmem:[%s6 + $0x30] sm:$0xff]
    %v271 = vld [vmem:[%s6 + $0x38] sm:$0xff]
    %v272 = vld [vmem:[%s6 + $0x40] sm:$0xff]
    %v273 = vld [vmem:[%s6 + $0x48] sm:$0xff]
    %v274 = vld [vmem:[%s6 + $0x50] sm:$0xff]
    %v275 = vld [vmem:[%s6 + $0x58] sm:$0xff]
    %v276 = vld [vmem:[%s6 + $0x60] sm:$0xff]
    %v277 = vld [vmem:[%s6 + $0x68] sm:$0xff]
    %v278 = vld [vmem:[%s6 + $0x70] sm:$0xff]
    %v279 = vld [vmem:[%s6 + $0x78] sm:$0xff]
    %v280 = vld [vmem:[%s7] sm:$0x1]
    %v281 = vld [vmem:[%s8] sm:$0x1]
    %v298 = vunpack.c.l.b16 %v248
    %v299 = vunpack.c.l.b16 %v249
    %v300 = vunpack.c.l.b16 %v250
    %v301 = vunpack.c.l.b16 %v251
    %v302 = vunpack.c.l.b16 %v252
    %v303 = vunpack.c.l.b16 %v253
    %v304 = vunpack.c.l.b16 %v254
    %v305 = vunpack.c.l.b16 %v255
    %v306 = vunpack.c.l.b16 %v256
    %v307 = vunpack.c.l.b16 %v257
    %v308 = vunpack.c.l.b16 %v258
    %v309 = vunpack.c.l.b16 %v259
    %v310 = vunpack.c.l.b16 %v260
    %v311 = vunpack.c.l.b16 %v261
    %v312 = vunpack.c.l.b16 %v262
    %v313 = vunpack.c.l.b16 %v263
    %v314 = vpack.c.b16 %v299, %v298
    %v315 = vpack.c.b16 %v301, %v300
    %v316 = vpack.c.b16 %v303, %v302
    %v317 = vpack.c.b16 %v305, %v304
    %v318 = vpack.c.b16 %v307, %v306
    %v319 = vpack.c.b16 %v309, %v308
    %v320 = vpack.c.b16 %v311, %v310
    %v321 = vpack.c.b16 %v313, %v312
    %330 = vmatpush.bf16.msra.mxu0 %v321
    %331 = vmatpush.bf16.msra.mxu0 %v320
    %332 = vmatpush.bf16.msra.mxu0 %v319
    %333 = vmatpush.bf16.msra.mxu0 %v318
    %334 = vmatpush.bf16.msra.mxu0 %v317
    %335 = vmatpush.bf16.msra.mxu0 %v316
    %336 = vmatpush.bf16.msra.mxu0 %v315
    %337 = vmatpush.bf16.msra.mxu0 %v314
    %338 = vmatmul.bf16.gmra.mxu0 %v247
    %v339 = vpop.f32.mrf.mxu0
    %v340 = vadd.f32 0.0, %v339
    %v341 = vpop.f32.mrf.mxu0
    %342 = vdwg.mxu0
    %v343 = vsel %vm163, %v340, 0.0
    %v344 = vrot.slane %v343, 4
    %v345 = vadd.f32 %v343, %v344
    %v346 = vrot.slane %v345, 2
    %v347 = vadd.f32 %v345, %v346
    %v348 = vrot.slane %v347, 1
    %v349 = vadd.f32 %v347, %v348
    %v350 = vmul.f32 %v340, %v340
    %v351 = vsel %vm163, %v350, 0.0
    %v352 = vrot.slane %v351, 4
    %v353 = vadd.f32 %v351, %v352
    %v354 = vrot.slane %v353, 2
    %v355 = vadd.f32 %v353, %v354
    %v356 = vrot.slane %v355, 1
    %v357 = vadd.f32 %v355, %v356
    %358 = vmatpush.msra.mxu0 %v279
    %359 = vmatpush.msra.mxu0 %v278
    %360 = vmatpush.msra.mxu0 %v277
    %361 = vmatpush.msra.mxu0 %v276
    %362 = vmatpush.msra.mxu0 %v275
    %363 = vmatpush.msra.mxu0 %v274
    %364 = vmatpush.msra.mxu0 %v273
    %365 = vmatpush.msra.mxu0 %v272
    %366 = vmatpush.msra.mxu0 %v271
    %367 = vmatpush.msra.mxu0 %v270
    %368 = vmatpush.msra.mxu0 %v269
    %369 = vmatpush.msra.mxu0 %v268
    %370 = vmatpush.msra.mxu0 %v267
    %371 = vmatpush.msra.mxu0 %v266
    %372 = vmatpush.msra.mxu0 %v265
    %373 = vmatpush.msra.mxu0 %v264
    %374 = vmatmul.f32.gmra.mxu0 %v349
    %v375 = vpop.f32.mrf.mxu0
    %v376 = vadd.f32 0.0, %v375
    %377 = vdwg.mxu0
    %378 = vmatpush.msra.mxu0 %v279
    %379 = vmatpush.msra.mxu0 %v278
    %380 = vmatpush.msra.mxu0 %v277
    %381 = vmatpush.msra.mxu0 %v276
    %382 = vmatpush.msra.mxu0 %v275
    %383 = vmatpush.msra.mxu0 %v274
    %384 = vmatpush.msra.mxu0 %v273
    %385 = vmatpush.msra.mxu0 %v272
    %386 = vmatpush.msra.mxu0 %v271
    %387 = vmatpush.msra.mxu0 %v270
    %388 = vmatpush.msra.mxu0 %v269
    %389 = vmatpush.msra.mxu0 %v268
    %390 = vmatpush.msra.mxu0 %v267
    %391 = vmatpush.msra.mxu0 %v266
    %392 = vmatpush.msra.mxu0 %v265
    %393 = vmatpush.msra.mxu0 %v264
    %394 = vmatmul.f32.gmra.mxu0 %v357
    %v395 = vpop.f32.mrf.mxu0
    %v396 = vadd.f32 0.0, %v395
    %397 = vdwg.mxu0
    %v398 = vmul.f32 %v376, %v376
    %v399 = vsub.f32 %v396, %v398
    %v400 = vmax.f32 %v399, 0.0
    %v401 = vadd.f32 %v400, 1e-05
    %v402 = vrsqrt.pop %v401
    %v403 = vmul.f32 %v402, %v401
    %v404 = vmul.f32 %v403, %v402
    %v405 = vmul.f32 0.5, %v404
    %v406 = vsub.f32 1.5, %v405
    %v407 = vmul.f32 %v402, %v406
    %vm408 = vweird.f32 %v401
    %vm409 = vweird.f32 %v402
    %vm410 = vmor %vm408, %vm409
    %v411 = vsel %vm410, %v402, %v407
    %v412 = vmul.f32 %v280, %v411
    %v413 = vmul.f32 %v376, %v412
    %v414 = vsub.f32 %v281, %v413
    %v416 = vperm.slane %v412, 0
    %v418 = vmul.f32 %v340, %v416
    %v420 = vperm.slane %v414, 0
    %v422 = vadd.f32 %v418, %v420
    %vm423 = vcmp.ge.f32.partialorder %v422, 0.0
    %v424 = vmul.f32 %v422, 0.2
    %v425 = vsel %vm423, %v422, %v424
    %v426 = vpack.c.bf16 %v425, %v425
    %v427 = vld [vmem:[%s9] sm:$0xf]
    %v428 = vld [vmem:[%s9 + $0x4] sm:$0xf]
    %v429 = vld [vmem:[%s9 + $0x8] sm:$0xf]
    %v430 = vld [vmem:[%s9 + $0xc] sm:$0xf]
    %v431 = vld [vmem:[%s9 + $0x10] sm:$0xf]
    %v432 = vld [vmem:[%s9 + $0x14] sm:$0xf]
    %v433 = vld [vmem:[%s9 + $0x18] sm:$0xf]
    %v434 = vld [vmem:[%s9 + $0x1c] sm:$0xf]
    %v435 = vld [vmem:[%s9 + $0x20] sm:$0xf]
    %v436 = vld [vmem:[%s9 + $0x24] sm:$0xf]
    %v437 = vld [vmem:[%s9 + $0x28] sm:$0xf]
    %v438 = vld [vmem:[%s9 + $0x2c] sm:$0xf]
    %v439 = vld [vmem:[%s9 + $0x30] sm:$0xf]
    %v440 = vld [vmem:[%s9 + $0x34] sm:$0xf]
    %v441 = vld [vmem:[%s9 + $0x38] sm:$0xf]
    %v442 = vld [vmem:[%s9 + $0x3c] sm:$0xf]
    %v443 = vld [vmem:[%s10] sm:$0xff]
    %v444 = vld [vmem:[%s10 + $0x8] sm:$0xff]
    %v445 = vld [vmem:[%s10 + $0x10] sm:$0xff]
    %v446 = vld [vmem:[%s10 + $0x18] sm:$0xff]
    %v447 = vld [vmem:[%s10 + $0x20] sm:$0xff]
    %v448 = vld [vmem:[%s10 + $0x28] sm:$0xff]
    %v449 = vld [vmem:[%s10 + $0x30] sm:$0xff]
    %v450 = vld [vmem:[%s10 + $0x38] sm:$0xff]
    %v451 = vld [vmem:[%s10 + $0x40] sm:$0xff]
    %v452 = vld [vmem:[%s10 + $0x48] sm:$0xff]
    %v453 = vld [vmem:[%s10 + $0x50] sm:$0xff]
    %v454 = vld [vmem:[%s10 + $0x58] sm:$0xff]
    %v455 = vld [vmem:[%s10 + $0x60] sm:$0xff]
    %v456 = vld [vmem:[%s10 + $0x68] sm:$0xff]
    %v457 = vld [vmem:[%s10 + $0x70] sm:$0xff]
    %v458 = vld [vmem:[%s10 + $0x78] sm:$0xff]
    %v459 = vld [vmem:[%s11] sm:$0x1]
    %v460 = vld [vmem:[%s12] sm:$0x1]
    %v477 = vunpack.c.l.b16 %v427
    %v478 = vunpack.c.l.b16 %v428
    %v479 = vunpack.c.l.b16 %v429
    %v480 = vunpack.c.l.b16 %v430
    %v481 = vunpack.c.l.b16 %v431
    %v482 = vunpack.c.l.b16 %v432
    %v483 = vunpack.c.l.b16 %v433
    %v484 = vunpack.c.l.b16 %v434
    %v485 = vunpack.c.l.b16 %v435
    %v486 = vunpack.c.l.b16 %v436
    %v487 = vunpack.c.l.b16 %v437
    %v488 = vunpack.c.l.b16 %v438
    %v489 = vunpack.c.l.b16 %v439
    %v490 = vunpack.c.l.b16 %v440
    %v491 = vunpack.c.l.b16 %v441
    %v492 = vunpack.c.l.b16 %v442
    %v493 = vpack.c.b16 %v478, %v477
    %v494 = vpack.c.b16 %v480, %v479
    %v495 = vpack.c.b16 %v482, %v481
    %v496 = vpack.c.b16 %v484, %v483
    %v497 = vpack.c.b16 %v486, %v485
    %v498 = vpack.c.b16 %v488, %v487
    %v499 = vpack.c.b16 %v490, %v489
    %v500 = vpack.c.b16 %v492, %v491
    %509 = vmatpush.bf16.msra.mxu0 %v500
    %510 = vmatpush.bf16.msra.mxu0 %v499
    %511 = vmatpush.bf16.msra.mxu0 %v498
    %512 = vmatpush.bf16.msra.mxu0 %v497
    %513 = vmatpush.bf16.msra.mxu0 %v496
    %514 = vmatpush.bf16.msra.mxu0 %v495
    %515 = vmatpush.bf16.msra.mxu0 %v494
    %516 = vmatpush.bf16.msra.mxu0 %v493
    %517 = vmatmul.bf16.gmra.mxu0 %v426
    %v518 = vpop.f32.mrf.mxu0
    %v519 = vadd.f32 0.0, %v518
    %v520 = vpop.f32.mrf.mxu0
    %521 = vdwg.mxu0
    %v522 = vsel %vm163, %v519, 0.0
    %v523 = vrot.slane %v522, 4
    %v524 = vadd.f32 %v522, %v523
    %v525 = vrot.slane %v524, 2
    %v526 = vadd.f32 %v524, %v525
    %v527 = vrot.slane %v526, 1
    %v528 = vadd.f32 %v526, %v527
    %v529 = vmul.f32 %v519, %v519
    %v530 = vsel %vm163, %v529, 0.0
    %v531 = vrot.slane %v530, 4
    %v532 = vadd.f32 %v530, %v531
    %v533 = vrot.slane %v532, 2
    %v534 = vadd.f32 %v532, %v533
    %v535 = vrot.slane %v534, 1
    %v536 = vadd.f32 %v534, %v535
    %537 = vmatpush.msra.mxu0 %v458
    %538 = vmatpush.msra.mxu0 %v457
    %539 = vmatpush.msra.mxu0 %v456
    %540 = vmatpush.msra.mxu0 %v455
    %541 = vmatpush.msra.mxu0 %v454
    %542 = vmatpush.msra.mxu0 %v453
    %543 = vmatpush.msra.mxu0 %v452
    %544 = vmatpush.msra.mxu0 %v451
    %545 = vmatpush.msra.mxu0 %v450
    %546 = vmatpush.msra.mxu0 %v449
    %547 = vmatpush.msra.mxu0 %v448
    %548 = vmatpush.msra.mxu0 %v447
    %549 = vmatpush.msra.mxu0 %v446
    %550 = vmatpush.msra.mxu0 %v445
    %551 = vmatpush.msra.mxu0 %v444
    %552 = vmatpush.msra.mxu0 %v443
    %553 = vmatmul.f32.gmra.mxu0 %v528
    %v554 = vpop.f32.mrf.mxu0
    %v555 = vadd.f32 0.0, %v554
    %556 = vdwg.mxu0
    %557 = vmatpush.msra.mxu0 %v458
    %558 = vmatpush.msra.mxu0 %v457
    %559 = vmatpush.msra.mxu0 %v456
    %560 = vmatpush.msra.mxu0 %v455
    %561 = vmatpush.msra.mxu0 %v454
    %562 = vmatpush.msra.mxu0 %v453
    %563 = vmatpush.msra.mxu0 %v452
    %564 = vmatpush.msra.mxu0 %v451
    %565 = vmatpush.msra.mxu0 %v450
    %566 = vmatpush.msra.mxu0 %v449
    %567 = vmatpush.msra.mxu0 %v448
    %568 = vmatpush.msra.mxu0 %v447
    %569 = vmatpush.msra.mxu0 %v446
    %570 = vmatpush.msra.mxu0 %v445
    %571 = vmatpush.msra.mxu0 %v444
    %572 = vmatpush.msra.mxu0 %v443
    %573 = vmatmul.f32.gmra.mxu0 %v536
    %v574 = vpop.f32.mrf.mxu0
    %v575 = vadd.f32 0.0, %v574
    %576 = vdwg.mxu0
    %v577 = vmul.f32 %v555, %v555
    %v578 = vsub.f32 %v575, %v577
    %v579 = vmax.f32 %v578, 0.0
    %v580 = vadd.f32 %v579, 1e-05
    %v581 = vrsqrt.pop %v580
    %v582 = vmul.f32 %v581, %v580
    %v583 = vmul.f32 %v582, %v581
    %v584 = vmul.f32 0.5, %v583
    %v585 = vsub.f32 1.5, %v584
    %v586 = vmul.f32 %v581, %v585
    %vm587 = vweird.f32 %v580
    %vm588 = vweird.f32 %v581
    %vm589 = vmor %vm587, %vm588
    %v590 = vsel %vm589, %v581, %v586
    %v591 = vmul.f32 %v459, %v590
    %v592 = vmul.f32 %v555, %v591
    %v593 = vsub.f32 %v460, %v592
    %v595 = vperm.slane %v591, 0
    %v597 = vmul.f32 %v519, %v595
    %v599 = vperm.slane %v593, 0
    %v601 = vadd.f32 %v597, %v599
    %vm602 = vcmp.ge.f32.partialorder %v601, 0.0
    %v603 = vmul.f32 %v601, 0.2
    %v604 = vsel %vm602, %v601, %v603
    %v605 = vpack.c.bf16 %v604, %v604
    %v606 = vld [vmem:[%s13] sm:$0xf]
    %v607 = vld [vmem:[%s13 + $0x4] sm:$0xf]
    %v608 = vld [vmem:[%s13 + $0x8] sm:$0xf]
    %v609 = vld [vmem:[%s13 + $0xc] sm:$0xf]
    %v610 = vld [vmem:[%s13 + $0x10] sm:$0xf]
    %v611 = vld [vmem:[%s13 + $0x14] sm:$0xf]
    %v612 = vld [vmem:[%s13 + $0x18] sm:$0xf]
    %v613 = vld [vmem:[%s13 + $0x1c] sm:$0xf]
    %v614 = vld [vmem:[%s13 + $0x20] sm:$0xf]
    %v615 = vld [vmem:[%s13 + $0x24] sm:$0xf]
    %v616 = vld [vmem:[%s13 + $0x28] sm:$0xf]
    %v617 = vld [vmem:[%s13 + $0x2c] sm:$0xf]
    %v618 = vld [vmem:[%s13 + $0x30] sm:$0xf]
    %v619 = vld [vmem:[%s13 + $0x34] sm:$0xf]
    %v620 = vld [vmem:[%s13 + $0x38] sm:$0xf]
    %v621 = vld [vmem:[%s13 + $0x3c] sm:$0xf]
    %v622 = vld [vmem:[%s14] sm:$0xff]
    %v623 = vld [vmem:[%s14 + $0x8] sm:$0xff]
    %v624 = vld [vmem:[%s14 + $0x10] sm:$0xff]
    %v625 = vld [vmem:[%s14 + $0x18] sm:$0xff]
    %v626 = vld [vmem:[%s14 + $0x20] sm:$0xff]
    %v627 = vld [vmem:[%s14 + $0x28] sm:$0xff]
    %v628 = vld [vmem:[%s14 + $0x30] sm:$0xff]
    %v629 = vld [vmem:[%s14 + $0x38] sm:$0xff]
    %v630 = vld [vmem:[%s14 + $0x40] sm:$0xff]
    %v631 = vld [vmem:[%s14 + $0x48] sm:$0xff]
    %v632 = vld [vmem:[%s14 + $0x50] sm:$0xff]
    %v633 = vld [vmem:[%s14 + $0x58] sm:$0xff]
    %v634 = vld [vmem:[%s14 + $0x60] sm:$0xff]
    %v635 = vld [vmem:[%s14 + $0x68] sm:$0xff]
    %v636 = vld [vmem:[%s14 + $0x70] sm:$0xff]
    %v637 = vld [vmem:[%s14 + $0x78] sm:$0xff]
    %v638 = vld [vmem:[%s15] sm:$0x1]
    %v639 = vld [vmem:[%s16] sm:$0x1]
    %v656 = vunpack.c.l.b16 %v606
    %v657 = vunpack.c.l.b16 %v607
    %v658 = vunpack.c.l.b16 %v608
    %v659 = vunpack.c.l.b16 %v609
    %v660 = vunpack.c.l.b16 %v610
    %v661 = vunpack.c.l.b16 %v611
    %v662 = vunpack.c.l.b16 %v612
    %v663 = vunpack.c.l.b16 %v613
    %v664 = vunpack.c.l.b16 %v614
    %v665 = vunpack.c.l.b16 %v615
    %v666 = vunpack.c.l.b16 %v616
    %v667 = vunpack.c.l.b16 %v617
    %v668 = vunpack.c.l.b16 %v618
    %v669 = vunpack.c.l.b16 %v619
    %v670 = vunpack.c.l.b16 %v620
    %v671 = vunpack.c.l.b16 %v621
    %v672 = vpack.c.b16 %v657, %v656
    %v673 = vpack.c.b16 %v659, %v658
    %v674 = vpack.c.b16 %v661, %v660
    %v675 = vpack.c.b16 %v663, %v662
    %v676 = vpack.c.b16 %v665, %v664
    %v677 = vpack.c.b16 %v667, %v666
    %v678 = vpack.c.b16 %v669, %v668
    %v679 = vpack.c.b16 %v671, %v670
    %688 = vmatpush.bf16.msra.mxu0 %v679
    %689 = vmatpush.bf16.msra.mxu0 %v678
    %690 = vmatpush.bf16.msra.mxu0 %v677
    %691 = vmatpush.bf16.msra.mxu0 %v676
    %692 = vmatpush.bf16.msra.mxu0 %v675
    %693 = vmatpush.bf16.msra.mxu0 %v674
    %694 = vmatpush.bf16.msra.mxu0 %v673
    %695 = vmatpush.bf16.msra.mxu0 %v672
    %696 = vmatmul.bf16.gmra.mxu0 %v605
    %v697 = vpop.f32.mrf.mxu0
    %v698 = vadd.f32 0.0, %v697
    %v699 = vpop.f32.mrf.mxu0
    %700 = vdwg.mxu0
    %v701 = vsel %vm163, %v698, 0.0
    %v702 = vrot.slane %v701, 4
    %v703 = vadd.f32 %v701, %v702
    %v704 = vrot.slane %v703, 2
    %v705 = vadd.f32 %v703, %v704
    %v706 = vrot.slane %v705, 1
    %v707 = vadd.f32 %v705, %v706
    %v708 = vmul.f32 %v698, %v698
    %v709 = vsel %vm163, %v708, 0.0
    %v710 = vrot.slane %v709, 4
    %v711 = vadd.f32 %v709, %v710
    %v712 = vrot.slane %v711, 2
    %v713 = vadd.f32 %v711, %v712
    %v714 = vrot.slane %v713, 1
    %v715 = vadd.f32 %v713, %v714
    %716 = vmatpush.msra.mxu0 %v637
    %717 = vmatpush.msra.mxu0 %v636
    %718 = vmatpush.msra.mxu0 %v635
    %719 = vmatpush.msra.mxu0 %v634
    %720 = vmatpush.msra.mxu0 %v633
    %721 = vmatpush.msra.mxu0 %v632
    %722 = vmatpush.msra.mxu0 %v631
    %723 = vmatpush.msra.mxu0 %v630
    %724 = vmatpush.msra.mxu0 %v629
    %725 = vmatpush.msra.mxu0 %v628
    %726 = vmatpush.msra.mxu0 %v627
    %727 = vmatpush.msra.mxu0 %v626
    %728 = vmatpush.msra.mxu0 %v625
    %729 = vmatpush.msra.mxu0 %v624
    %730 = vmatpush.msra.mxu0 %v623
    %731 = vmatpush.msra.mxu0 %v622
    %732 = vmatmul.f32.gmra.mxu0 %v707
    %v733 = vpop.f32.mrf.mxu0
    %v734 = vadd.f32 0.0, %v733
    %735 = vdwg.mxu0
    %736 = vmatpush.msra.mxu0 %v637
    %737 = vmatpush.msra.mxu0 %v636
    %738 = vmatpush.msra.mxu0 %v635
    %739 = vmatpush.msra.mxu0 %v634
    %740 = vmatpush.msra.mxu0 %v633
    %741 = vmatpush.msra.mxu0 %v632
    %742 = vmatpush.msra.mxu0 %v631
    %743 = vmatpush.msra.mxu0 %v630
    %744 = vmatpush.msra.mxu0 %v629
    %745 = vmatpush.msra.mxu0 %v628
    %746 = vmatpush.msra.mxu0 %v627
    %747 = vmatpush.msra.mxu0 %v626
    %748 = vmatpush.msra.mxu0 %v625
    %749 = vmatpush.msra.mxu0 %v624
    %750 = vmatpush.msra.mxu0 %v623
    %751 = vmatpush.msra.mxu0 %v622
    %752 = vmatmul.f32.gmra.mxu0 %v715
    %v753 = vpop.f32.mrf.mxu0
    %v754 = vadd.f32 0.0, %v753
    %755 = vdwg.mxu0
    %v756 = vmul.f32 %v734, %v734
    %v757 = vsub.f32 %v754, %v756
    %v758 = vmax.f32 %v757, 0.0
    %v759 = vadd.f32 %v758, 1e-05
    %v760 = vrsqrt.pop %v759
    %v761 = vmul.f32 %v760, %v759
    %v762 = vmul.f32 %v761, %v760
    %v763 = vmul.f32 0.5, %v762
    %v764 = vsub.f32 1.5, %v763
    %v765 = vmul.f32 %v760, %v764
    %vm766 = vweird.f32 %v759
    %vm767 = vweird.f32 %v760
    %vm768 = vmor %vm766, %vm767
    %v769 = vsel %vm768, %v760, %v765
    %v770 = vmul.f32 %v638, %v769
    %v771 = vmul.f32 %v734, %v770
    %v772 = vsub.f32 %v639, %v771
    %v774 = vperm.slane %v770, 0
    %v776 = vmul.f32 %v698, %v774
    %v778 = vperm.slane %v772, 0
    %v780 = vadd.f32 %v776, %v778
    %vm781 = vcmp.ge.f32.partialorder %v780, 0.0
    %v782 = vmul.f32 %v780, 0.2
    %v783 = vsel %vm781, %v780, %v782
    %784 = vst [vmem:[#allocation3] sm:$0x3] %v783
    %v785 = vld [vmem:[%s17] sm:$0xff]
    %v786 = vld [vmem:[%s17 + $0x8] sm:$0xff]
    %v787 = vld [vmem:[%s17 + $0x10] sm:$0xff]
    %v788 = vld [vmem:[%s17 + $0x18] sm:$0xff]
    %v789 = vld [vmem:[%s17 + $0x20] sm:$0xff]
    %v790 = vld [vmem:[%s17 + $0x28] sm:$0xff]
    %v791 = vld [vmem:[%s17 + $0x30] sm:$0xff]
    %v792 = vld [vmem:[%s17 + $0x38] sm:$0xff]
    %v793 = vld [vmem:[%s17 + $0x40] sm:$0xff]
    %v794 = vld [vmem:[%s17 + $0x48] sm:$0xff]
    %v795 = vld [vmem:[%s17 + $0x50] sm:$0xff]
    %v796 = vld [vmem:[%s17 + $0x58] sm:$0xff]
    %v797 = vld [vmem:[%s17 + $0x60] sm:$0xff]
    %v798 = vld [vmem:[%s17 + $0x68] sm:$0xff]
    %v799 = vld [vmem:[%s17 + $0x70] sm:$0xff]
    %v800 = vld [vmem:[%s17 + $0x78] sm:$0xff]
    %v801 = vld [vmem:[#allocation2] sm:$0x1]
    %v803 = vperm.slane %v801, 0
    %805 = vmatpush.msra.mxu0 %v800
    %806 = vmatpush.msra.mxu0 %v799
    %807 = vmatpush.msra.mxu0 %v798
    %808 = vmatpush.msra.mxu0 %v797
    %809 = vmatpush.msra.mxu0 %v796
    %810 = vmatpush.msra.mxu0 %v795
    %811 = vmatpush.msra.mxu0 %v794
    %812 = vmatpush.msra.mxu0 %v793
    %813 = vmatpush.msra.mxu0 %v792
    %814 = vmatpush.msra.mxu0 %v791
    %815 = vmatpush.msra.mxu0 %v790
    %816 = vmatpush.msra.mxu0 %v789
    %817 = vmatpush.msra.mxu0 %v788
    %818 = vmatpush.msra.mxu0 %v787
    %819 = vmatpush.msra.mxu0 %v786
    %820 = vmatpush.msra.mxu0 %v785
    %821 = vmatmul.f32.gmra.mxu0 %v783
    %v822 = vpop.f32.mrf.mxu0
    %v823 = vadd.f32 %v803, %v822
    %824 = vdwg.mxu0
    %v825 = vxor.u32 %v823, 2147483648
    %v826 = vmul.f32 %v825, 1.442695
    %v827 = vpow.pop %v826
    %v828 = vadd.f32 %v827, 1.0
    %v829 = vrcp.pop %v828
    %v830 = vmul.f32 %v828, %v829
    %v831 = vsub.f32 1.0, %v830
    %v832 = vmul.f32 %v829, %v831
    %v833 = vadd.f32 %v829, %v832
    %vm834 = vweird.f32 %v828
    %vm835 = vweird.f32 %v829
    %vm836 = vmor %vm834, %vm835
    %v837 = vsel %vm836, %v829, %v833
    %v838 = vand.u32 2147483647, %v828
    %vm839 = vcmp.eq.f32.partialorder %v838, 8.507059e+37
    %v840 = vand.u32 %v828, 2147483648
    %v841 = vor.u32 1.1754944e-38, %v840
    %v842 = vsel %vm839, %v841, %v837
    %v843 = vmul.f32 1.0, %v842
    %vm844 = vcmask 1024
    %845 = vst.msk [vmem:[%s19] sm:$0x3] %vm844, %v843
    // Predicated region
    $region78: #{disc_forward.1} parent=1 // pred_check
      _
    $region79: #{disc_forward.1} parent=1 // pred_check_branch
      %847 = sbr.rel (0) target = $region81
    $region80: #{disc_forward.1} parent=1 // pred_region
      _
    $region81: #{disc_forward.1} parent=1 // pred_fallthru
      _
    // Predicated region
    $region82: #{disc_forward.1} parent=1 // pred_check
      _
    $region83: #{disc_forward.1} parent=1 // pred_check_branch
      %849 = sbr.rel (0) target = $region85
    $region84: #{disc_forward.1} parent=1 // pred_region
      %851 = vsyncadd [#allocation4], 0
      %s853 = sshll.u32 [#allocation3], 4
      %s854 = int_to_ptr.vmem [resolvable:$true] %s853
      %s855 = sshll.u32 %s20, 4
      %s856 = int_to_ptr.hbm [resolvable:$true] %s855
      %858 = dma.vmem_to_hbm [thread:$0]  %s854, 32, %s856, [#allocation4]
    $region85: #{disc_forward.1} parent=1 // pred_fallthru
      _
    // Predicated region
    $region86: #{disc_forward.1} parent=1 // pred_check
      _
    $region87: #{disc_forward.1} parent=1 // pred_check_branch
      %860 = sbr.rel (0) target = $region89
    $region88: #{disc_forward.1} parent=1 // pred_region
      _
    $region89: #{disc_forward.1} parent=1 // pred_fallthru
      _
    // Predicated region
    $region90: #{disc_forward.1} parent=1 // pred_check
      _
    $region91: #{disc_forward.1} parent=1 // pred_check_branch
      %862 = sbr.rel (0) target = $region93
    $region92: #{disc_forward.1} parent=1 // pred_region
      %864 = dma.done [#allocation4], 32
    $region93: #{disc_forward.1} parent=1 // pred_fallthru
      _
    %865 = vsyncpa [#allocation4], 1

</llo_original>
